<compile_context>
chip_gen: v5e
topology: v5e:2x2
jax: 0.10.0
libtpu: 0.0.40
codegen_flags: <defaults>
</compile_context>

<pallas_src>
import functools

import jax
import jax.numpy as jnp
from jax.experimental import pallas as pl
from jax.experimental.pallas import tpu as pltpu


# Use the fused resident-A kernel while the bf16 adjacency is <= 16 MiB
# (N up to ~2.8k); with the headroom below this stays well under the scoped
# VMEM limits of v5e/v6e and the 64 MiB physical VMEM of v7x.
_FUSED_A_BYTE_LIMIT = 16 * 1024 * 1024

_DEFAULT_TM = 512   # A row tile     (sublane axis)
_DEFAULT_TK = 512   # A column tile  (lane axis / reduction axis)


def _round_up(x, m):
    return ((x + m - 1) // m) * m


# ---------------------------------------------------------------------------
# Kernels
# ---------------------------------------------------------------------------
def fused_gcn_kernel(a_ref, xw1_ref, b1_ref, w2_ref, b2_ref, o_ref):
    """Resident-A fast path: both aggregations fused, A read from HBM once."""
    a = a_ref[...]                                                  # [N, N] bf16
    h1 = jnp.dot(a, xw1_ref[...], preferred_element_type=jnp.float32)
    h1 = jnp.maximum(h1 + b1_ref[...], 0.0)                         # [N, H] f32
    xw2 = jnp.dot(h1, w2_ref[...], preferred_element_type=jnp.float32)
    z = jnp.dot(a, xw2.astype(jnp.bfloat16),
                preferred_element_type=jnp.float32) + b2_ref[...]   # [N, C] f32
    m = jnp.max(z, axis=1, keepdims=True)
    s = z - m
    lse = jnp.log(jnp.sum(jnp.exp(s), axis=1, keepdims=True))
    o_ref[...] = s - lse


def agg_kernel(a_ref, xw_ref, b_ref, o_ref, acc_ref, *, activation):
    """One tile of  out = activation(A @ XW + b); reduction over grid axis 1."""
    k = pl.program_id(1)

    @pl.when(k == 0)
    def _():
        acc_ref[...] = jnp.zeros_like(acc_ref)

    acc_ref[...] += jnp.dot(a_ref[...], xw_ref[...],
                            preferred_element_type=jnp.float32)

    @pl.when(k == pl.num_programs(1) - 1)
    def _():
        z = acc_ref[...] + b_ref[...]
        if activation == "relu":
            o_ref[...] = jnp.maximum(z, 0.0)
        else:  # log_softmax over the class (lane) axis
            m = jnp.max(z, axis=1, keepdims=True)
            s = z - m
            lse = jnp.log(jnp.sum(jnp.exp(s), axis=1, keepdims=True))
            o_ref[...] = s - lse


# ---------------------------------------------------------------------------
# Pallas wrappers
# ---------------------------------------------------------------------------
def _aggregate_tiled(a_pad, xw_pad, bias, n_valid_rows, activation, tm, tk):
    """out[:n] = activation(A_pad @ XW_pad + bias), tiled over (rows, k)."""
    rp, kp = a_pad.shape
    w = xw_pad.shape[1]
    grid = (rp // tm, kp // tk)

    # Per-step VMEM footprint: double-buffered inputs/outputs + accumulator.
    footprint = (2 * tm * tk * 2        # A tile, bf16, x2 buffers
                 + 2 * tk * w * 2       # XW slice, bf16, x2 buffers
                 + 2 * tm * w * 4       # output tile, f32, x2 buffers
                 + tm * w * 4           # f32 accumulator scratch
                 + 2 * w * 4)           # bias
    vmem_limit = int(footprint + (8 << 20))   # headroom for compiler scratch

    out = pl.pallas_call(
        functools.partial(agg_kernel, activation=activation),
        out_shape=jax.ShapeDtypeStruct((rp, w), jnp.float32),
        grid_spec=pltpu.PrefetchScalarGridSpec(
            num_scalar_prefetch=0,
            grid=grid,
            in_specs=[
                pl.BlockSpec((tm, tk), lambda i, k: (i, k)),   # A tile
                pl.BlockSpec((tk, w), lambda i, k: (k, 0)),    # narrow XW slice
                pl.BlockSpec((1, w), lambda i, k: (0, 0)),     # bias
            ],
            out_specs=pl.BlockSpec((tm, w), lambda i, k: (i, 0)),
            scratch_shapes=[pltpu.VMEM((tm, w), jnp.float32)],
        ),
        compiler_params=pltpu.CompilerParams(
            dimension_semantics=("parallel", "arbitrary"),
            vmem_limit_bytes=vmem_limit),
        cost_estimate=pl.CostEstimate(
            flops=int(2 * rp * kp * w),
            transcendentals=int(rp * w) if activation == "log_softmax" else 0,
            bytes_accessed=int(rp * kp * 2 + (rp // tm) * kp * w * 2
                               + rp * w * 4)),
    )(a_pad, xw_pad, bias)
    return out[:n_valid_rows]


def _gcn_forward_tiled(a_norm, x, params, tm=_DEFAULT_TM, tk=_DEFAULT_TK):
    w1, b1, w2, b2 = params
    n = x.shape[0]
    h = w1.shape[1]
    c = w2.shape[1]

    # Tile sizes: shrink for tiny graphs; pad N so tiles divide evenly.
    tm = min(tm, _round_up(n, 8))
    tk = min(tk, _round_up(n, 128))
    rp = _round_up(n, tm)
    kp = _round_up(n, tk)

    a_pad = jnp.zeros((rp, kp), jnp.bfloat16).at[:n, :n].set(
        a_norm.astype(jnp.bfloat16))

    # Hoisted feature GEMM (X @ W1) -- plain XLA, keeps X out of the kernel.
    xw1 = (x.astype(jnp.float32) @ w1).astype(jnp.bfloat16)            # [N, H]
    xw1_pad = jnp.zeros((kp, h), jnp.bfloat16).at[:n].set(xw1)
    b1_2d = b1.reshape(1, -1).astype(jnp.float32)

    h1 = _aggregate_tiled(a_pad, xw1_pad, b1_2d, n, "relu", tm, tk)    # [N, H]

    xw2 = (h1 @ w2).astype(jnp.bfloat16)                               # [N, C]
    xw2_pad = jnp.zeros((kp, c), jnp.bfloat16).at[:n].set(xw2)
    b2_2d = b2.reshape(1, -1).astype(jnp.float32)

    return _aggregate_tiled(a_pad, xw2_pad, b2_2d, n, "log_softmax", tm, tk)


def _gcn_forward_fused(a_norm, x, params):
    w1, b1, w2, b2 = params
    n = x.shape[0]
    h = w1.shape[1]
    c = w2.shape[1]

    a_bf16 = a_norm.astype(jnp.bfloat16)
    xw1 = (x.astype(jnp.float32) @ w1).astype(jnp.bfloat16)   # hoisted GEMM

    vmem = pl.BlockSpec(memory_space=pltpu.MemorySpace.VMEM)
    vmem_limit = int(min(2 * n * n + (16 << 20), 48 << 20))
    flops = 2 * n * n * (h + c) + 2 * n * h * c

    return pl.pallas_call(
        fused_gcn_kernel,
        out_shape=jax.ShapeDtypeStruct((n, c), jnp.float32),
        in_specs=[vmem] * 5,
        out_specs=vmem,
        compiler_params=pltpu.CompilerParams(vmem_limit_bytes=vmem_limit),
        cost_estimate=pl.CostEstimate(
            flops=int(flops),
            transcendentals=int(n * c),
            bytes_accessed=int(2 * n * n + 2 * n * h + 4 * n * c)),
    )(a_bf16, xw1,
      b1.reshape(1, -1).astype(jnp.float32),
      w2.astype(jnp.float32),
      b2.reshape(1, -1).astype(jnp.float32))


# ---------------------------------------------------------------------------
# Graph glue + public forward
# ---------------------------------------------------------------------------
def build_norm_adj(edge_index, edge_weight, num_nodes):
    """Dense D^{-1/2}(A + I)D^{-1/2}, A[target, source] += w (PyG gcn_norm,
    add_remaining_self_loops semantics: existing self-loop weights are kept,
    missing self-loops are added with weight 1.0)."""
    src, dst = edge_index[0], edge_index[1]          # src = row, dst = col
    w = edge_weight.astype(jnp.float32)
    is_loop = src == dst

    a = jnp.zeros((num_nodes, num_nodes), jnp.float32)
    a = a.at[dst, src].add(jnp.where(is_loop, 0.0, w))   # off-diagonal edges

    loop_w = jnp.ones((num_nodes,), jnp.float32)          # fill_value = 1.0
    loop_idx = jnp.where(is_loop, src, num_nodes)         # OOB index -> dropped
    loop_w = loop_w.at[loop_idx].set(w, mode="drop")      # keep existing weight
    a = a + jnp.diag(loop_w)

    deg = jnp.sum(a, axis=1)
    dinv = jnp.where(deg > 0.0, jax.lax.rsqrt(deg), 0.0)
    return dinv[:, None] * a * dinv[None, :]


def gcn_forward(x, edge_index, edge_weight, params, force_tiled=False):
    n = x.shape[0]
    a_norm = build_norm_adj(edge_index, edge_weight, n)
    if force_tiled or (2 * n * n) > _FUSED_A_BYTE_LIMIT:
        return _gcn_forward_tiled(a_norm, x, params)
    return _gcn_forward_fused(a_norm, x, params)


def gcn_reference(x, edge_index, edge_weight, params):
    """Pure-JAX f32 reference of the GCN_ forward pass."""
    a = build_norm_adj(edge_index, edge_weight, x.shape[0])
    w1, b1, w2, b2 = params
    h = jnp.maximum(a @ (x.astype(jnp.float32) @ w1) + b1, 0.0)
    z = a @ (h @ w2) + b2
    return jax.nn.log_softmax(z, axis=1)


def init_params(key, num_features, num_classes, hidden=16):
    """Deterministic synthetic init (glorot-like); GCN_ hardcodes hidden=16."""
    k1, k2 = jax.random.split(key)
    w1 = jax.random.normal(k1, (num_features, hidden), jnp.float32) * (
        1.0 / jnp.sqrt(jnp.float32(num_features)))
    b1 = jnp.zeros((hidden,), jnp.float32)
    w2 = jax.random.normal(k2, (hidden, num_classes), jnp.float32) * (
        1.0 / jnp.sqrt(jnp.float32(hidden)))
    b2 = jnp.zeros((num_classes,), jnp.float32)
    return (w1, b1, w2, b2)


if __name__ == "__main__":
    key = jax.random.PRNGKey(0)
    k_x, k_ei, k_ew, k_p = jax.random.split(key, 4)

    num_nodes = 16
    num_features = 8
    num_classes = 4
    num_edges = 40

    x = jax.random.normal(k_x, (num_nodes, num_features), jnp.float32)
    edge_index = jax.random.randint(k_ei, (2, num_edges), 0, num_nodes,
                                    dtype=jnp.int32)
    edge_weight = jax.random.uniform(k_ew, (num_edges,), jnp.float32,
                                     minval=0.1, maxval=1.0)
    params = init_params(k_p, num_features, num_classes)

    ref = gcn_reference(x, edge_index, edge_weight, params)

    out_fused = gcn_forward(x, edge_index, edge_weight, params)
    out_tiled = gcn_forward(x, edge_index, edge_weight, params,
                            force_tiled=True)
    jax.block_until_ready((out_fused, out_tiled))

    assert out_fused.shape == (num_nodes, num_classes)
    assert out_tiled.shape == (num_nodes, num_classes)

    for out in (out_fused, out_tiled):
        # rows of log_softmax must exponentiate-and-sum to 1
        row_sums = jnp.sum(jnp.exp(out), axis=1)
        assert jnp.allclose(row_sums, jnp.ones_like(row_sums), atol=1e-3)
        # bf16 adjacency / XW -> loose tolerance vs the f32 reference
        assert jnp.allclose(out, ref, atol=5e-2), float(
            jnp.max(jnp.abs(out - ref)))
    assert jnp.allclose(out_fused, out_tiled, atol=5e-2)

    print("KERNEL_OK")
</pallas_src>

<mosaic_0001>
module attributes {stable_mosaic.version = 11 : i64} {
  func.func @fused_gcn_kernel(%arg0: memref<16x16xbf16, #tpu.memory_space<vmem>>, %arg1: memref<16x16xbf16, #tpu.memory_space<vmem>>, %arg2: memref<1x16xf32, #tpu.memory_space<vmem>>, %arg3: memref<16x4xf32, #tpu.memory_space<vmem>>, %arg4: memref<1x4xf32, #tpu.memory_space<vmem>>, %arg5: memref<16x4xf32, #tpu.memory_space<vmem>>) attributes {dimension_semantics = [], scalar_prefetch = 0 : i64, scratch_operands = 0 : i64, tpu.core_type = #tpu.core_type<tc>} {
    %c0 = arith.constant 0 : index
    %c0_0 = arith.constant 0 : index
    %0 = vector.load %arg0[%c0, %c0_0] : memref<16x16xbf16, #tpu.memory_space<vmem>>, vector<16x16xbf16>
    %c0_1 = arith.constant 0 : index
    %c0_2 = arith.constant 0 : index
    %1 = vector.load %arg1[%c0_1, %c0_2] : memref<16x16xbf16, #tpu.memory_space<vmem>>, vector<16x16xbf16>
    %cst = arith.constant dense<0.000000e+00> : vector<16x16xf32>
    %2 = tpu.matmul %0, %1, %cst {dimension_numbers = #tpu.dot_dimension_numbers<[1], [0], [0], [1], [0, 0, 1, 1], [], []>} : vector<16x16xbf16>, vector<16x16xbf16>, vector<16x16xf32> -> vector<16x16xf32>
    %c0_3 = arith.constant 0 : index
    %c0_4 = arith.constant 0 : index
    %3 = vector.load %arg2[%c0_3, %c0_4] : memref<1x16xf32, #tpu.memory_space<vmem>>, vector<1x16xf32>
    %4 = vector.broadcast %3 : vector<1x16xf32> to vector<16x16xf32>
    %5 = arith.addf %2, %4 : vector<16x16xf32>
    %cst_5 = arith.constant 0.000000e+00 : f32
    %6 = vector.broadcast %cst_5 : f32 to vector<16x16xf32>
    %7 = arith.maximumf %5, %6 : vector<16x16xf32>
    %c0_6 = arith.constant 0 : index
    %c0_7 = arith.constant 0 : index
    %8 = vector.load %arg3[%c0_6, %c0_7] : memref<16x4xf32, #tpu.memory_space<vmem>>, vector<16x4xf32>
    %cst_8 = arith.constant dense<0.000000e+00> : vector<16x4xf32>
    %9 = tpu.matmul %7, %8, %cst_8 {dimension_numbers = #tpu.dot_dimension_numbers<[1], [0], [0], [1], [0, 0, 1, 1], [], []>} : vector<16x16xf32>, vector<16x4xf32>, vector<16x4xf32> -> vector<16x4xf32>
    %10 = arith.truncf %9 : vector<16x4xf32> to vector<16x4xbf16>
    %cst_9 = arith.constant dense<0.000000e+00> : vector<16x4xf32>
    %11 = tpu.matmul %0, %10, %cst_9 {dimension_numbers = #tpu.dot_dimension_numbers<[1], [0], [0], [1], [0, 0, 1, 1], [], []>} : vector<16x16xbf16>, vector<16x4xbf16>, vector<16x4xf32> -> vector<16x4xf32>
    %c0_10 = arith.constant 0 : index
    %c0_11 = arith.constant 0 : index
    %12 = vector.load %arg4[%c0_10, %c0_11] : memref<1x4xf32, #tpu.memory_space<vmem>>, vector<1x4xf32>
    %13 = vector.broadcast %12 : vector<1x4xf32> to vector<16x4xf32>
    %14 = arith.addf %11, %13 : vector<16x4xf32>
    %cst_12 = arith.constant dense<0xFF800000> : vector<16xf32>
    %15 = vector.multi_reduction <maximumf>, %14, %cst_12 [1] : vector<16x4xf32> to vector<16xf32>
    %16 = vector.shape_cast %15 : vector<16xf32> to vector<16x1xf32>
    %17 = vector.broadcast %16 : vector<16x1xf32> to vector<16x4xf32>
    %18 = arith.subf %14, %17 : vector<16x4xf32>
    %19 = math.exp %18 : vector<16x4xf32>
    %cst_13 = arith.constant dense<0.000000e+00> : vector<16xf32>
    %20 = vector.multi_reduction <add>, %19, %cst_13 [1] : vector<16x4xf32> to vector<16xf32>
    %21 = vector.shape_cast %20 : vector<16xf32> to vector<16x1xf32>
    %22 = math.log %21 : vector<16x1xf32>
    %23 = vector.broadcast %22 : vector<16x1xf32> to vector<16x4xf32>
    %24 = arith.subf %18, %23 : vector<16x4xf32>
    %c0_14 = arith.constant 0 : index
    %c0_15 = arith.constant 0 : index
    %25 = vector.load %arg5[%c0_14, %c0_15] : memref<16x4xf32, #tpu.memory_space<vmem>>, vector<16x4xf32>
    tpu.vector_store %arg5[%c0_14, %c0_15], %24 {strides = array<i32>} : memref<16x4xf32, #tpu.memory_space<vmem>>, vector<16x4xf32>,
    return
  }
}

</mosaic_0001>

<llo_original>
// kernel: tpu_custom_call.1
$region0: #{tpu_custom_call.1}
  #allocation0 [shape = 'u32[]', space=smem, size = 0x4, offset = 0x4, fixed_abs, tag = 'smem constant byte address 0x4 - core index']
  #allocation1 [shape = 'u32[72,128]{1,0:T(1,128)}', space=vmem, size = 0x9000, scoped, tag = 'internal scratch']
  %s0 = inlined_call_operand.vmem [shape: bf16[16,16], index: 0, kind: input, shape index: {}]
  %s1 = inlined_call_operand.vmem [shape: bf16[16,16], index: 1, kind: input, shape index: {}]
  %s2 = inlined_call_operand.vmem [shape: f32[1,16], index: 2, kind: input, shape index: {}]
  %s3 = inlined_call_operand.vmem [shape: f32[16,4], index: 3, kind: input, shape index: {}]
  %s4 = inlined_call_operand.vmem [shape: f32[1,4], index: 4, kind: input, shape index: {}]
  %s5 = inlined_call_operand.vmem [shape: f32[16,4], index: 5, kind: output, shape index: {}]
  %s6 = sld [smem:[#allocation0]]
  $region30: #{tpu_custom_call.1} parent=0
    _
  %s8 = ssub.s32 1, %s6
  %s9 = scalar_select 0, %s8, %s6
  // Predicated region
  $region2: #{tpu_custom_call.1} parent=0 // pred_check
    _
  $region3: #{tpu_custom_call.1} parent=0 // pred_check_branch
    %11 = sbr.rel (0) target = $region5
  $region4: #{tpu_custom_call.1} parent=0 // pred_region
    _
  $region5: #{tpu_custom_call.1} parent=0 // pred_fallthru
    _
  // Predicated region
  $region6: #{tpu_custom_call.1} parent=0 // pred_check
    _
  $region7: #{tpu_custom_call.1} parent=0 // pred_check_branch
    %13 = sbr.rel (0) target = $region9
  $region8: #{tpu_custom_call.1} parent=0 // pred_region
    _
  $region9: #{tpu_custom_call.1} parent=0 // pred_fallthru
    _
  // Predicated region
  $region10: #{tpu_custom_call.1} parent=0 // pred_check
    _
  $region11: #{tpu_custom_call.1} parent=0 // pred_check_branch
    %15 = sbr.rel (0) target = $region13
  $region12: #{tpu_custom_call.1} parent=0 // pred_region
    _
  $region13: #{tpu_custom_call.1} parent=0 // pred_fallthru
    _
  // Predicated region
  $region14: #{tpu_custom_call.1} parent=0 // pred_check
    _
  $region15: #{tpu_custom_call.1} parent=0 // pred_check_branch
    %17 = sbr.rel (0) target = $region17
  $region16: #{tpu_custom_call.1} parent=0 // pred_region
    _
  $region17: #{tpu_custom_call.1} parent=0 // pred_fallthru
    _
  // Predicated region
  $region18: #{tpu_custom_call.1} parent=0 // pred_check
    _
  $region19: #{tpu_custom_call.1} parent=0 // pred_check_branch
    %19 = sbr.rel (0) target = $region21
  $region20: #{tpu_custom_call.1} parent=0 // pred_region
    _
  $region21: #{tpu_custom_call.1} parent=0 // pred_fallthru
    _
  %v21 = vld [vmem:[%s0] sm:$0xf]
  %v22 = vld [vmem:[%s0 + $0x4] sm:$0xf]
  %v23 = vld [vmem:[%s1] sm:$0xf]
  %v24 = vld [vmem:[%s1 + $0x4] sm:$0xf]
  %v25 = vld [vmem:[%s2] sm:$0x1]
  %v27 = vperm.slane %v25, 0
  %v31 = vunpack.c.l.b16 %v21
  %v32 = vunpack.c.l.b16 %v22
  %v33 = vpack.c.b16 %v32, %v31
  %v36 = vunpack.c.l.b16 %v23
  %v37 = vunpack.c.l.b16 %v24
  %v38 = vpack.c.b16 %v37, %v36
  %vm40 = vcmask 130048
  %v42 = vsel %vm40, %v33, 0
  %44 = vmatpush.bf16.msra.mxu0 0
  %45 = vmatpush.bf16.msra.mxu0 0
  %46 = vmatpush.bf16.msra.mxu0 0
  %47 = vmatpush.bf16.msra.mxu0 0
  %48 = vmatpush.bf16.msra.mxu0 0
  %49 = vmatpush.bf16.msra.mxu0 0
  %50 = vmatpush.bf16.msra.mxu0 0
  %51 = vmatpush.bf16.msra.mxu0 %v38
  %52 = vmatmul.bf16.gmra.mxu0 %v42
  %v53 = vpop.f32.mrf.mxu0
  %v54 = vadd.f32 %v27, %v53
  %v55 = vpop.f32.mrf.mxu0
  %v56 = vadd.f32 %v27, %v55
  %57 = vdwg.mxu0
  %v58 = vmax.f32 %v54, 0.0
  %v59 = vmax.f32 %v56, 0.0
  %v60 = vld [vmem:[%s3] sm:$0xff]
  %v61 = vld [vmem:[%s3 + $0x8] sm:$0xff]
  %v63 = vsel %vm40, %v58, 0
  %v66 = vsel %vm40, %v59, 0
  %68 = vmatpush.msra.mxu0 0.0
  %69 = vmatpush.msra.mxu0 0.0
  %70 = vmatpush.msra.mxu0 0.0
  %71 = vmatpush.msra.mxu0 0.0
  %72 = vmatpush.msra.mxu0 0.0
  %73 = vmatpush.msra.mxu0 0.0
  %74 = vmatpush.msra.mxu0 0.0
  %75 = vmatpush.msra.mxu0 0.0
  %76 = vmatpush.msra.mxu0 0.0
  %77 = vmatpush.msra.mxu0 0.0
  %78 = vmatpush.msra.mxu0 0.0
  %79 = vmatpush.msra.mxu0 0.0
  %80 = vmatpush.msra.mxu0 0.0
  %81 = vmatpush.msra.mxu0 0.0
  %82 = vmatpush.msra.mxu0 %v61
  %83 = vmatpush.msra.mxu0 %v60
  %84 = vmatmul.f32.gmra.mxu0 %v63
  %v85 = vpop.f32.mrf.mxu0
  %v86 = vadd.f32 0.0, %v85
  %87 = vmatmul.f32.gmra.mxu0 %v66
  %v88 = vpop.f32.mrf.mxu0
  %v89 = vadd.f32 0.0, %v88
  %90 = vdwg.mxu0
  %v91 = vpack.c.bf16 %v89, %v86
  %v92 = vld [vmem:[%s4] sm:$0x1]
  %v94 = vperm.slane %v92, 0
  %96 = vmatpush.bf16.msra.mxu0 0
  %97 = vmatpush.bf16.msra.mxu0 0
  %98 = vmatpush.bf16.msra.mxu0 0
  %99 = vmatpush.bf16.msra.mxu0 0
  %100 = vmatpush.bf16.msra.mxu0 0
  %101 = vmatpush.bf16.msra.mxu0 0
  %102 = vmatpush.bf16.msra.mxu0 0
  %103 = vmatpush.bf16.msra.mxu0 %v91
  %104 = vmatmul.bf16.gmra.mxu0 %v42
  %v105 = vpop.f32.mrf.mxu0
  %v106 = vadd.f32 %v94, %v105
  %v107 = vpop.f32.mrf.mxu0
  %v108 = vadd.f32 %v94, %v107
  %109 = vdwg.mxu0
  %vm110 = vcmask 31744
  %v111 = vsel %vm110, %v106, -inf
  %112 = vmax.xlane.f32.xlu0 %v111
  %v113 = vpop.xlane.xlu0 %112
  %v114 = vsel %vm110, %v108, -inf
  %115 = vmax.xlane.f32.xlu0 %v114
  %v116 = vpop.xlane.xlu0 %115
  %v117 = vsub.f32 %v106, %v113
  %v118 = vsub.f32 %v108, %v116
  %v119 = vmul.f32 %v117, 1.442695
  %v120 = vpow.pop %v119
  %v121 = vmul.f32 %v118, 1.442695
  %v122 = vpow.pop %v121
  %v123 = vsel %vm110, %v120, 0.0
  %124 = vadd.xlane.f32.xlu0 %v123
  %v125 = vpop.xlane.xlu0 %124
  %v126 = vsel %vm110, %v122, 0.0
  %127 = vadd.xlane.f32.xlu0 %v126
  %v128 = vpop.xlane.xlu0 %127
  %v129 = vlog2.pop %v125
  %v130 = vmul.f32 %v129, 0.6931472
  %v131 = vlog2.pop %v128
  %v132 = vmul.f32 %v131, 0.6931472
  %v133 = vsub.f32 %v117, %v130
  %v134 = vsub.f32 %v118, %v132
  %135 = vst.msk [vmem:[%s5] sm:$0xff] %vm110, %v133
  %136 = vst.msk [vmem:[%s5 + $0x8] sm:$0xff] %vm110, %v134
  // Predicated region
  $region22: #{tpu_custom_call.1} parent=0 // pred_check
    _
  $region23: #{tpu_custom_call.1} parent=0 // pred_check_branch
    %138 = sbr.rel (0) target = $region25
  $region24: #{tpu_custom_call.1} parent=0 // pred_region
    _
  $region25: #{tpu_custom_call.1} parent=0 // pred_fallthru
    _
  // Predicated region
  $region26: #{tpu_custom_call.1} parent=0 // pred_check
    _
  $region27: #{tpu_custom_call.1} parent=0 // pred_check_branch
    %140 = sbr.rel (0) target = $region29
  $region28: #{tpu_custom_call.1} parent=0 // pred_region
    _
  $region29: #{tpu_custom_call.1} parent=0 // pred_fallthru
    _

</llo_original>
